<compile_context>
chip_gen: v7x
topology: tpu7x:2x2x1
jax: 0.10.0
libtpu: 0.0.40
codegen_flags: <defaults>
</compile_context>

<pallas_src>
import functools

import jax
import jax.numpy as jnp
from jax.experimental import pallas as pl
from jax.experimental.pallas import tpu as pltpu


# ----------------------------- helpers ---------------------------------------

def _round_up(x, m):
    return (x + m - 1) // m * m


def _apply_activation(x, activation):
    if activation == "linear":
        return x
    if activation == "relu":
        return jnp.maximum(x, 0.0)
    if activation == "sigmoid":
        return jax.nn.sigmoid(x)
    if activation == "tanh":
        return jnp.tanh(x)
    if activation == "elu":
        return jnp.where(x > 0, x, jnp.expm1(x))
    # TODO(synk): 'rrelu', 'param_relu', 'param_sigmoid' need learnable/random
    # alphas; not part of the chosen config.
    raise NotImplementedError(activation)


# ----------------------------- kernel -----------------------------------------

def encoder_kernel(*refs, activations):
    """Fused MLP encoder for one batch tile.

    refs = (x_ref, w0, b0, w1, b1, ..., o_ref).
    x tile is (block_m, 256); weights/biases are whole-array VMEM-resident
    blocks (constant index_map). Each layer: MXU matmul with f32 accumulation,
    f32 bias add + activation on the VPU/EUP.  Padding rows in the ragged last
    block only see relu/sigmoid (no fault-prone ops); their stores are masked.
    """
    x_ref = refs[0]
    o_ref = refs[-1]
    params = refs[1:-1]

    h = x_ref[...]
    for i, act in enumerate(activations):
        w = params[2 * i][...]          # (in_i, out_i), same dtype as x
        b = params[2 * i + 1][...]      # (1, out_i), f32
        h = jnp.dot(h, w, preferred_element_type=jnp.float32) + b
        h = _apply_activation(h, act)
    o_ref[...] = h.astype(o_ref.dtype)


# ----------------------------- wrapper ----------------------------------------

def encoder_forward(x, weights, biases, activations, *, block_m=None):
    """x: (N, H, W) in f32 or bf16 (streamed as-is). Returns (N, layers[-1]) f32."""
    n = x.shape[0]
    x_flat = x.reshape(n, -1)                  # nn.Flatten() glue (no dtype cast)
    compute_dtype = x_flat.dtype
    in_dim = x_flat.shape[1]
    out_dim = weights[-1].shape[1]

    # Batch tile: multiple of 8 sublanes; aim for ~8 grid steps so the
    # "parallel" batch axis shards across v7x's 2 TensorCores, capped at 2048
    # rows so double-buffered f32 x tiles (~4-5 MiB) fit every generation's
    # scoped VMEM default with room to spare.
    if block_m is None:
        block_m = min(2048, _round_up(pl.cdiv(n, 8), 8))
    block_m = max(8, _round_up(block_m, 8))
    grid = (pl.cdiv(n, block_m),)              # ragged last block handled by Pallas

    operands = [x_flat]
    in_specs = [pl.BlockSpec((block_m, in_dim), lambda i: (i, 0))]
    for w, b in zip(weights, biases):
        w = w.astype(compute_dtype)                 # tiny (~35 KB total)
        b2 = b.reshape(1, -1).astype(jnp.float32)   # bias added on f32 accum
        operands += [w, b2]
        # Constant index_map -> weights DMA'd once, VMEM-resident across steps.
        in_specs += [pl.BlockSpec(w.shape, lambda i: (0, 0)),
                     pl.BlockSpec(b2.shape, lambda i: (0, 0))]

    itemsize = jnp.dtype(compute_dtype).itemsize
    flops = 2 * n * sum(w.shape[0] * w.shape[1] for w in weights)
    transcendentals = n * sum(
        w.shape[1] for w, act in zip(weights, activations)
        if act in ("sigmoid", "tanh", "elu"))
    bytes_accessed = (
        n * in_dim * itemsize + n * out_dim * 4
        + sum(w.size * itemsize for w in weights)
        + sum(b.size * 4 for b in biases))

    kernel = functools.partial(encoder_kernel, activations=tuple(activations))

    out = pl.pallas_call(
        kernel,
        out_shape=jax.ShapeDtypeStruct((_round_up(n, block_m), out_dim),
                                       jnp.float32),
        grid=grid,
        in_specs=in_specs,
        out_specs=pl.BlockSpec((block_m, out_dim), lambda i: (i, 0)),
        compiler_params=pltpu.CompilerParams(
            dimension_semantics=("parallel",)),
        cost_estimate=pl.CostEstimate(
            flops=flops,
            transcendentals=transcendentals,
            bytes_accessed=bytes_accessed),
    )(*operands)

    return out[:n]


# ----------------------------- param init -------------------------------------

def xavier_normal(key, fan_in, fan_out):
    # torch.nn.init.xavier_normal_ : std = gain * sqrt(2 / (fan_in + fan_out))
    std = (2.0 / (fan_in + fan_out)) ** 0.5
    # stored as (in, out) == transpose of PyTorch's (out, in) weight
    return std * jax.random.normal(key, (fan_in, fan_out), dtype=jnp.float32)


def build_encoder_params(key, layer_sizes):
    weights, biases = [], []
    for k in range(len(layer_sizes) - 1):
        key, sub = jax.random.split(key)
        weights.append(xavier_normal(sub, layer_sizes[k], layer_sizes[k + 1]))
        biases.append(jnp.zeros((layer_sizes[k + 1],), dtype=jnp.float32))
    return weights, biases


# ----------------------------- reference --------------------------------------

def encoder_reference(x, weights, biases, activations):
    h = x.reshape(x.shape[0], -1).astype(jnp.float32)
    for (w, b, act) in zip(weights, biases, activations):
        h = h @ w + b
        h = _apply_activation(h, act)
    return h


# ----------------------------- main --------------------------------------------

if __name__ == "__main__":
    # module config
    resolution = (16, 16)
    hidden_layers = [32, 16, 8]          # args.layers
    layer_sizes = [resolution[0] * resolution[1]] + hidden_layers
    act_hid, act_code = "relu", "sigmoid"
    activations = [act_hid] * (len(layer_sizes) - 2) + [act_code]

    key = jax.random.PRNGKey(0)
    key, kx = jax.random.split(key)
    batch = 2
    x = jax.random.normal(kx, (batch, resolution[0], resolution[1]),
                          dtype=jnp.float32)
    weights, biases = build_encoder_params(key, layer_sizes)

    # 1) Small-batch check (matches the PyTorch module's forward at batch=2).
    out = jax.block_until_ready(encoder_forward(x, weights, biases, activations))
    ref = encoder_reference(x, weights, biases, activations)
    assert out.shape == (batch, layer_sizes[-1]), out.shape
    assert jnp.allclose(out, ref, atol=1e-5, rtol=1e-5), "mismatch vs reference"

    # 2) Batch not a multiple of the tile: exercises the cdiv grid / ragged
    #    last block path (no wrapper-side padding pass over x).
    key, kx2 = jax.random.split(key)
    n2 = 300
    x2 = jax.random.normal(kx2, (n2, resolution[0], resolution[1]),
                           dtype=jnp.float32)
    out2 = jax.block_until_ready(
        encoder_forward(x2, weights, biases, activations, block_m=128))
    ref2 = encoder_reference(x2, weights, biases, activations)
    assert out2.shape == (n2, layer_sizes[-1]), out2.shape
    assert jnp.allclose(out2, ref2, atol=1e-5, rtol=1e-5), "mismatch (tiled)"

    # 3) x already bf16 end-to-end (producer-side cast): the kernel streams the
    #    half-size rows directly — no extra HBM pass — and accumulates in f32.
    x2_bf16 = x2.astype(jnp.bfloat16)
    out_bf16 = jax.block_until_ready(
        encoder_forward(x2_bf16, weights, biases, activations, block_m=128))
    assert out_bf16.shape == (n2, layer_sizes[-1]), out_bf16.shape
    assert jnp.allclose(out_bf16, ref2, atol=5e-2), "mismatch (bf16)"

    # 4) Default occupancy-aware block_m heuristic on a larger batch.
    key, kx3 = jax.random.split(key)
    n3 = 1000
    x3 = jax.random.normal(kx3, (n3, resolution[0], resolution[1]),
                           dtype=jnp.float32)
    out3 = jax.block_until_ready(
        encoder_forward(x3, weights, biases, activations))
    ref3 = encoder_reference(x3, weights, biases, activations)
    assert out3.shape == (n3, layer_sizes[-1]), out3.shape
    assert jnp.allclose(out3, ref3, atol=1e-5, rtol=1e-5), "mismatch (auto tile)"

    print("KERNEL_OK")
</pallas_src>

<mosaic_0001>
module attributes {stable_mosaic.version = 11 : i64} {
  func.func @encoder_kernel(%arg0: i32, %arg1: memref<8x256xf32, #tpu.memory_space<vmem>>, %arg2: memref<256x32xf32, #tpu.memory_space<vmem>>, %arg3: memref<1x32xf32, #tpu.memory_space<vmem>>, %arg4: memref<32x16xf32, #tpu.memory_space<vmem>>, %arg5: memref<1x16xf32, #tpu.memory_space<vmem>>, %arg6: memref<16x8xf32, #tpu.memory_space<vmem>>, %arg7: memref<1x8xf32, #tpu.memory_space<vmem>>, %arg8: memref<8x8xf32, #tpu.memory_space<vmem>>) attributes {dimension_semantics = [#tpu.dimension_semantics<parallel>], iteration_bounds = array<i64: 1>, scalar_prefetch = 0 : i64, scratch_operands = 0 : i64, tpu.core_type = #tpu.core_type<tc>, window_params = [{transform_indices = @transform_0, window_bounds = array<i64: 8, 256>}, {pipeline_mode = #tpu.pipeline_mode<synchronous>, transform_indices = @transform_1, window_bounds = array<i64: 256, 32>}, {pipeline_mode = #tpu.pipeline_mode<synchronous>, transform_indices = @transform_2, window_bounds = array<i64: 1, 32>}, {pipeline_mode = #tpu.pipeline_mode<synchronous>, transform_indices = @transform_3, window_bounds = array<i64: 32, 16>}, {pipeline_mode = #tpu.pipeline_mode<synchronous>, transform_indices = @transform_4, window_bounds = array<i64: 1, 16>}, {pipeline_mode = #tpu.pipeline_mode<synchronous>, transform_indices = @transform_5, window_bounds = array<i64: 16, 8>}, {pipeline_mode = #tpu.pipeline_mode<synchronous>, transform_indices = @transform_6, window_bounds = array<i64: 1, 8>}, {transform_indices = @transform_7, window_bounds = array<i64: 8, 8>}]} {
    %c0 = arith.constant 0 : index
    %c0_0 = arith.constant 0 : index
    %0 = vector.load %arg1[%c0, %c0_0] : memref<8x256xf32, #tpu.memory_space<vmem>>, vector<8x256xf32>
    %c0_1 = arith.constant 0 : index
    %c0_2 = arith.constant 0 : index
    %1 = vector.load %arg2[%c0_1, %c0_2] : memref<256x32xf32, #tpu.memory_space<vmem>>, vector<256x32xf32>
    %c0_3 = arith.constant 0 : index
    %c0_4 = arith.constant 0 : index
    %2 = vector.load %arg3[%c0_3, %c0_4] : memref<1x32xf32, #tpu.memory_space<vmem>>, vector<1x32xf32>
    %cst = arith.constant dense<0.000000e+00> : vector<8x32xf32>
    %3 = tpu.matmul %0, %1, %cst {dimension_numbers = #tpu.dot_dimension_numbers<[1], [0], [0], [1], [0, 0, 1, 1], [], []>} : vector<8x256xf32>, vector<256x32xf32>, vector<8x32xf32> -> vector<8x32xf32>
    %4 = vector.broadcast %2 : vector<1x32xf32> to vector<8x32xf32>
    %5 = arith.addf %3, %4 : vector<8x32xf32>
    %cst_5 = arith.constant 0.000000e+00 : f32
    %6 = vector.broadcast %cst_5 : f32 to vector<8x32xf32>
    %7 = arith.maximumf %5, %6 : vector<8x32xf32>
    %c0_6 = arith.constant 0 : index
    %c0_7 = arith.constant 0 : index
    %8 = vector.load %arg4[%c0_6, %c0_7] : memref<32x16xf32, #tpu.memory_space<vmem>>, vector<32x16xf32>
    %c0_8 = arith.constant 0 : index
    %c0_9 = arith.constant 0 : index
    %9 = vector.load %arg5[%c0_8, %c0_9] : memref<1x16xf32, #tpu.memory_space<vmem>>, vector<1x16xf32>
    %cst_10 = arith.constant dense<0.000000e+00> : vector<8x16xf32>
    %10 = tpu.matmul %7, %8, %cst_10 {dimension_numbers = #tpu.dot_dimension_numbers<[1], [0], [0], [1], [0, 0, 1, 1], [], []>} : vector<8x32xf32>, vector<32x16xf32>, vector<8x16xf32> -> vector<8x16xf32>
    %11 = vector.broadcast %9 : vector<1x16xf32> to vector<8x16xf32>
    %12 = arith.addf %10, %11 : vector<8x16xf32>
    %cst_11 = arith.constant 0.000000e+00 : f32
    %13 = vector.broadcast %cst_11 : f32 to vector<8x16xf32>
    %14 = arith.maximumf %12, %13 : vector<8x16xf32>
    %c0_12 = arith.constant 0 : index
    %c0_13 = arith.constant 0 : index
    %15 = vector.load %arg6[%c0_12, %c0_13] : memref<16x8xf32, #tpu.memory_space<vmem>>, vector<16x8xf32>
    %c0_14 = arith.constant 0 : index
    %c0_15 = arith.constant 0 : index
    %16 = vector.load %arg7[%c0_14, %c0_15] : memref<1x8xf32, #tpu.memory_space<vmem>>, vector<1x8xf32>
    %cst_16 = arith.constant dense<0.000000e+00> : vector<8x8xf32>
    %17 = tpu.matmul %14, %15, %cst_16 {dimension_numbers = #tpu.dot_dimension_numbers<[1], [0], [0], [1], [0, 0, 1, 1], [], []>} : vector<8x16xf32>, vector<16x8xf32>, vector<8x8xf32> -> vector<8x8xf32>
    %18 = vector.broadcast %16 : vector<1x8xf32> to vector<8x8xf32>
    %19 = arith.addf %17, %18 : vector<8x8xf32>
    %20 = arith.negf %19 : vector<8x8xf32>
    %21 = math.exp %20 : vector<8x8xf32>
    %cst_17 = arith.constant 1.000000e+00 : f32
    %22 = vector.broadcast %cst_17 : f32 to vector<8x8xf32>
    %23 = arith.addf %22, %21 : vector<8x8xf32>
    %24 = arith.divf %22, %23 : vector<8x8xf32>
    %c0_18 = arith.constant 0 : index
    %c0_19 = arith.constant 0 : index
    %25 = vector.load %arg8[%c0_18, %c0_19] : memref<8x8xf32, #tpu.memory_space<vmem>>, vector<8x8xf32>
    tpu.vector_store %arg8[%c0_18, %c0_19], %24 {strides = array<i32>} : memref<8x8xf32, #tpu.memory_space<vmem>>, vector<8x8xf32>,
    return
  }
  func.func @transform_0(%arg0: i32) -> (i32, i32) {
    %c0_i32 = arith.constant 0 : i32
    %c0_i32_0 = arith.constant 0 : i32
    return %arg0, %c0_i32 : i32, i32
  }
  func.func @transform_1(%arg0: i32) -> (i32, i32) {
    %c0_i32 = arith.constant 0 : i32
    %c0_i32_0 = arith.constant 0 : i32
    %c0_i32_1 = arith.constant 0 : i32
    return %c0_i32, %c0_i32_0 : i32, i32
  }
  func.func @transform_2(%arg0: i32) -> (i32, i32) {
    %c0_i32 = arith.constant 0 : i32
    %c0_i32_0 = arith.constant 0 : i32
    %c0_i32_1 = arith.constant 0 : i32
    return %c0_i32, %c0_i32_0 : i32, i32
  }
  func.func @transform_3(%arg0: i32) -> (i32, i32) {
    %c0_i32 = arith.constant 0 : i32
    %c0_i32_0 = arith.constant 0 : i32
    %c0_i32_1 = arith.constant 0 : i32
    return %c0_i32, %c0_i32_0 : i32, i32
  }
  func.func @transform_4(%arg0: i32) -> (i32, i32) {
    %c0_i32 = arith.constant 0 : i32
    %c0_i32_0 = arith.constant 0 : i32
    %c0_i32_1 = arith.constant 0 : i32
    return %c0_i32, %c0_i32_0 : i32, i32
  }
  func.func @transform_5(%arg0: i32) -> (i32, i32) {
    %c0_i32 = arith.constant 0 : i32
    %c0_i32_0 = arith.constant 0 : i32
    %c0_i32_1 = arith.constant 0 : i32
    return %c0_i32, %c0_i32_0 : i32, i32
  }
  func.func @transform_6(%arg0: i32) -> (i32, i32) {
    %c0_i32 = arith.constant 0 : i32
    %c0_i32_0 = arith.constant 0 : i32
    %c0_i32_1 = arith.constant 0 : i32
    return %c0_i32, %c0_i32_0 : i32, i32
  }
  func.func @transform_7(%arg0: i32) -> (i32, i32) {
    %c0_i32 = arith.constant 0 : i32
    %c0_i32_0 = arith.constant 0 : i32
    return %arg0, %c0_i32 : i32, i32
  }
}

</mosaic_0001>

<llo_original>
// kernel: tpu_custom_call.1
$region0: #{tpu_custom_call.1}
  #allocation0 [shape = 'u32[]', space=smem, size = 0x4, offset = 0x4, fixed_abs, tag = 'smem constant byte address 0x4 - core index']
  #allocation1 [shape = 'u32[144,128]{1,0:T(1,128)}', space=vmem, size = 0x12000, scoped, tag = 'internal scratch']
  %s0 = inlined_call_operand.vmem [shape: f32[2,256], index: 0, kind: input, shape index: {}]
  %s1 = inlined_call_operand.vmem [shape: f32[256,32], index: 1, kind: input, shape index: {}]
  %s2 = inlined_call_operand.vmem [shape: f32[1,32], index: 2, kind: input, shape index: {}]
  %s3 = inlined_call_operand.vmem [shape: f32[32,16], index: 3, kind: input, shape index: {}]
  %s4 = inlined_call_operand.vmem [shape: f32[1,16], index: 4, kind: input, shape index: {}]
  %s5 = inlined_call_operand.vmem [shape: f32[16,8], index: 5, kind: input, shape index: {}]
  %s6 = inlined_call_operand.vmem [shape: f32[1,8], index: 6, kind: input, shape index: {}]
  %s7 = inlined_call_operand.hbm [shape: f32[8,8], index: 7, kind: output, shape index: {}]
  %s8 = sld [smem:[#allocation0]]
  $region38: #{tpu_custom_call.1} parent=0
    _
  %s10 = ssub.s32 1, %s8
  %s11 = scalar_select 0, %s10, %s8
  $region1: #{tpu_custom_call.1} parent=0
    #allocation2 [shape = 'u8[4096]{0}', space=vmem, size = 0x1000, scoped, tag = 'output window, operand 0, single buffered']
    #allocation3 [shape = 's32[1]{0}', space=sflag, size = 0x4, scoped, tag = 'scoped memory for tpu_custom_call.1']
    %12 = vsyncpa [#allocation3], 0
    // Predicated region
    $region2: #{tpu_custom_call.1} parent=1 // pred_check
      _
    $region3: #{tpu_custom_call.1} parent=1 // pred_check_branch
      %14 = sbr.rel (0) target = $region5
    $region4: #{tpu_custom_call.1} parent=1 // pred_region
      _
    $region5: #{tpu_custom_call.1} parent=1 // pred_fallthru
      _
    // Predicated region
    $region6: #{tpu_custom_call.1} parent=1 // pred_check
      _
    $region7: #{tpu_custom_call.1} parent=1 // pred_check_branch
      %16 = sbr.rel (0) target = $region9
    $region8: #{tpu_custom_call.1} parent=1 // pred_region
      _
    $region9: #{tpu_custom_call.1} parent=1 // pred_fallthru
      _
    // Predicated region
    $region10: #{tpu_custom_call.1} parent=1 // pred_check
      _
    $region11: #{tpu_custom_call.1} parent=1 // pred_check_branch
      %18 = sbr.rel (0) target = $region13
    $region12: #{tpu_custom_call.1} parent=1 // pred_region
      _
    $region13: #{tpu_custom_call.1} parent=1 // pred_fallthru
      _
    // Predicated region
    $region14: #{tpu_custom_call.1} parent=1 // pred_check
      _
    $region15: #{tpu_custom_call.1} parent=1 // pred_check_branch
      %20 = sbr.rel (0) target = $region17
    $region16: #{tpu_custom_call.1} parent=1 // pred_region
      _
    $region17: #{tpu_custom_call.1} parent=1 // pred_fallthru
      _
    // Predicated region
    $region18: #{tpu_custom_call.1} parent=1 // pred_check
      _
    $region19: #{tpu_custom_call.1} parent=1 // pred_check_branch
      %22 = sbr.rel (0) target = $region21
    $region20: #{tpu_custom_call.1} parent=1 // pred_region
      _
    $region21: #{tpu_custom_call.1} parent=1 // pred_fallthru
      _
    // Predicated region
    $region22: #{tpu_custom_call.1} parent=1 // pred_check
      _
    $region23: #{tpu_custom_call.1} parent=1 // pred_check_branch
      %24 = sbr.rel (0) target = $region25
    $region24: #{tpu_custom_call.1} parent=1 // pred_region
      _
    $region25: #{tpu_custom_call.1} parent=1 // pred_fallthru
      _
    // Predicated region
    $region26: #{tpu_custom_call.1} parent=1 // pred_check
      _
    $region27: #{tpu_custom_call.1} parent=1 // pred_check_branch
      %26 = sbr.rel (0) target = $region29
    $region28: #{tpu_custom_call.1} parent=1 // pred_region
      _
    $region29: #{tpu_custom_call.1} parent=1 // pred_fallthru
      _
    %v27 = vld [vmem:[%s0] sm:$0xf]
    %v28 = vld [vmem:[%s0 + $0x4] sm:$0xf]
    %v29 = vld [vmem:[%s0 + $0x8] sm:$0xf]
    %v30 = vld [vmem:[%s0 + $0xc] sm:$0xf]
    %v31 = vld [vmem:[%s1] sm:$0xff]
    %v32 = vld [vmem:[%s1 + $0x8] sm:$0xff]
    %v33 = vld [vmem:[%s1 + $0x10] sm:$0xff]
    %v34 = vld [vmem:[%s1 + $0x18] sm:$0xff]
    %v35 = vld [vmem:[%s1 + $0x20] sm:$0xff]
    %v36 = vld [vmem:[%s1 + $0x28] sm:$0xff]
    %v37 = vld [vmem:[%s1 + $0x30] sm:$0xff]
    %v38 = vld [vmem:[%s1 + $0x38] sm:$0xff]
    %v39 = vld [vmem:[%s1 + $0x40] sm:$0xff]
    %v40 = vld [vmem:[%s1 + $0x48] sm:$0xff]
    %v41 = vld [vmem:[%s1 + $0x50] sm:$0xff]
    %v42 = vld [vmem:[%s1 + $0x58] sm:$0xff]
    %v43 = vld [vmem:[%s1 + $0x60] sm:$0xff]
    %v44 = vld [vmem:[%s1 + $0x68] sm:$0xff]
    %v45 = vld [vmem:[%s1 + $0x70] sm:$0xff]
    %v46 = vld [vmem:[%s1 + $0x78] sm:$0xff]
    %v47 = vld [vmem:[%s1 + $0x80] sm:$0xff]
    %v48 = vld [vmem:[%s1 + $0x88] sm:$0xff]
    %v49 = vld [vmem:[%s1 + $0x90] sm:$0xff]
    %v50 = vld [vmem:[%s1 + $0x98] sm:$0xff]
    %v51 = vld [vmem:[%s1 + $0xa0] sm:$0xff]
    %v52 = vld [vmem:[%s1 + $0xa8] sm:$0xff]
    %v53 = vld [vmem:[%s1 + $0xb0] sm:$0xff]
    %v54 = vld [vmem:[%s1 + $0xb8] sm:$0xff]
    %v55 = vld [vmem:[%s1 + $0xc0] sm:$0xff]
    %v56 = vld [vmem:[%s1 + $0xc8] sm:$0xff]
    %v57 = vld [vmem:[%s1 + $0xd0] sm:$0xff]
    %v58 = vld [vmem:[%s1 + $0xd8] sm:$0xff]
    %v59 = vld [vmem:[%s1 + $0xe0] sm:$0xff]
    %v60 = vld [vmem:[%s1 + $0xe8] sm:$0xff]
    %v61 = vld [vmem:[%s1 + $0xf0] sm:$0xff]
    %v62 = vld [vmem:[%s1 + $0xf8] sm:$0xff]
    %v63 = vld [vmem:[%s2] sm:$0x1]
    %v65 = vlaneseq
    %v66 = vshrl.u32 %v65, 7
    %v67 = vsub.s32 0, %v66
    %v68 = vrot.slane %v63, %v67
    %v74 = vcombine.low %v27, %v28
    %v75 = vcombine.low %v29, %v30
    %v77 = vunpack.c.l.s4 1983009808
    %v78 = vunpack.c.0.s8 %v77
    %v79 = vlaneseq
    %v80 = vshrl.u32 %v79, 7
    %v81 = vsub.s32 %v78, %v80
    %v82 = vrot.slane %v74, %v81
    %v84 = vunpack.c.l.s4 1983009808
    %v85 = vunpack.c.0.s8 %v84
    %v86 = vlaneseq
    %v87 = vshrl.u32 %v86, 7
    %v88 = vsub.s32 %v85, %v87
    %v89 = vrot.slane %v75, %v88
    %v90 = vcombine.low %v82, %v89
    %v91 = vcombine.high %v82, %v89
    %94 = vmatprep.subr.mxu0 0.0
    %95 = vmatpush1.msra.mxu0 %v31
    %96 = vmatprep.subr.mxu0 0.0
    %97 = vmatpush1.msra.mxu0 %v32
    %98 = vmatprep.subr.mxu0 0.0
    %99 = vmatpush1.msra.mxu0 %v33
    %100 = vmatprep.subr.mxu0 0.0
    %101 = vmatpush1.msra.mxu0 %v34
    %102 = vmatprep.subr.mxu0 0.0
    %103 = vmatpush1.msra.mxu0 %v35
    %104 = vmatprep.subr.mxu0 0.0
    %105 = vmatpush1.msra.mxu0 %v36
    %106 = vmatprep.subr.mxu0 0.0
    %107 = vmatpush1.msra.mxu0 %v37
    %108 = vmatprep.subr.mxu0 0.0
    %109 = vmatpush1.msra.mxu0 %v38
    %110 = vmatprep.subr.mxu0 0.0
    %111 = vmatpush1.msra.mxu0 %v39
    %112 = vmatprep.subr.mxu0 0.0
    %113 = vmatpush1.msra.mxu0 %v40
    %114 = vmatprep.subr.mxu0 0.0
    %115 = vmatpush1.msra.mxu0 %v41
    %116 = vmatprep.subr.mxu0 0.0
    %117 = vmatpush1.msra.mxu0 %v42
    %118 = vmatprep.subr.mxu0 0.0
    %119 = vmatpush1.msra.mxu0 %v43
    %120 = vmatprep.subr.mxu0 0.0
    %121 = vmatpush1.msra.mxu0 %v44
    %122 = vmatprep.subr.mxu0 0.0
    %123 = vmatpush1.msra.mxu0 %v45
    %124 = vmatprep.subr.mxu0 0.0
    %125 = vmatpush1.msra.mxu0 %v46
    %126 = vmatprep.subr.mxu0 0.0
    %127 = vmatpush1.msra.mxu0 %v47
    %128 = vmatprep.subr.mxu0 0.0
    %129 = vmatpush1.msra.mxu0 %v48
    %130 = vmatprep.subr.mxu0 0.0
    %131 = vmatpush1.msra.mxu0 %v49
    %132 = vmatprep.subr.mxu0 0.0
    %133 = vmatpush1.msra.mxu0 %v50
    %134 = vmatprep.subr.mxu0 0.0
    %135 = vmatpush1.msra.mxu0 %v51
    %136 = vmatprep.subr.mxu0 0.0
    %137 = vmatpush1.msra.mxu0 %v52
    %138 = vmatprep.subr.mxu0 0.0
    %139 = vmatpush1.msra.mxu0 %v53
    %140 = vmatprep.subr.mxu0 0.0
    %141 = vmatpush1.msra.mxu0 %v54
    %142 = vmatprep.subr.mxu0 0.0
    %143 = vmatpush1.msra.mxu0 %v55
    %144 = vmatprep.subr.mxu0 0.0
    %145 = vmatpush1.msra.mxu0 %v56
    %146 = vmatprep.subr.mxu0 0.0
    %147 = vmatpush1.msra.mxu0 %v57
    %148 = vmatprep.subr.mxu0 0.0
    %149 = vmatpush1.msra.mxu0 %v58
    %150 = vmatprep.subr.mxu0 0.0
    %151 = vmatpush1.msra.mxu0 %v59
    %152 = vmatprep.subr.mxu0 0.0
    %153 = vmatpush1.msra.mxu0 %v60
    %154 = vmatprep.subr.mxu0 0.0
    %155 = vmatpush1.msra.mxu0 %v61
    %156 = vmatprep.subr.mxu0 0.0
    %157 = vmatpush1.msra.mxu0 %v62
    %158 = vmatprep.mubr.f32.mxu0 %v91
    %159 = vmatmul.mubr.f32.gmra.mrb[0].mxu0 %v90
    %v160 = vpop.f32.mrb[0].mxu0
    %v161 = vadd.f32 %v68, %v160
    %v162 = vpop.f32.mrb[0].mxu0
    %163 = vdwg.mxu0
    %v164 = vmax.f32 %v161, 0.0
    %v165 = vld [vmem:[%s3] sm:$0xff]
    %v166 = vld [vmem:[%s3 + $0x8] sm:$0xff]
    %v167 = vld [vmem:[%s3 + $0x10] sm:$0xff]
    %v168 = vld [vmem:[%s3 + $0x18] sm:$0xff]
    %v169 = vld [vmem:[%s4] sm:$0x1]
    %v171 = vlaneseq
    %v172 = vshrl.u32 %v171, 7
    %v173 = vsub.s32 0, %v172
    %v174 = vrot.slane %v169, %v173
    %vm176 = vcmask 261120
    %v178 = vsel %vm176, %v164, 0
    %180 = vmatprep.subr.mxu0 0.0
    %181 = vmatpush1.msra.mxu0 %v165
    %182 = vmatprep.subr.mxu0 0.0
    %183 = vmatpush1.msra.mxu0 %v166
    %184 = vmatprep.subr.mxu0 0.0
    %185 = vmatpush1.msra.mxu0 %v167
    %186 = vmatprep.subr.mxu0 0.0
    %187 = vmatpush1.msra.mxu0 %v168
    %188 = vmatprep.subr.mxu0 0.0
    %189 = vmatpush1.msra.mxu0 0.0
    %190 = vmatprep.subr.mxu0 0.0
    %191 = vmatpush1.msra.mxu0 0.0
    %192 = vmatprep.subr.mxu0 0.0
    %193 = vmatpush1.msra.mxu0 0.0
    %194 = vmatprep.subr.mxu0 0.0
    %195 = vmatpush1.msra.mxu0 0.0
    %196 = vmatprep.subr.mxu0 0.0
    %197 = vmatpush1.msra.mxu0 0.0
    %198 = vmatprep.subr.mxu0 0.0
    %199 = vmatpush1.msra.mxu0 0.0
    %200 = vmatprep.subr.mxu0 0.0
    %201 = vmatpush1.msra.mxu0 0.0
    %202 = vmatprep.subr.mxu0 0.0
    %203 = vmatpush1.msra.mxu0 0.0
    %204 = vmatprep.subr.mxu0 0.0
    %205 = vmatpush1.msra.mxu0 0.0
    %206 = vmatprep.subr.mxu0 0.0
    %207 = vmatpush1.msra.mxu0 0.0
    %208 = vmatprep.subr.mxu0 0.0
    %209 = vmatpush1.msra.mxu0 0.0
    %210 = vmatprep.subr.mxu0 0.0
    %211 = vmatpush1.msra.mxu0 0.0
    %212 = vmatprep.subr.mxu0 0.0
    %213 = vmatpush1.msra.mxu0 0.0
    %214 = vmatprep.subr.mxu0 0.0
    %215 = vmatpush1.msra.mxu0 0.0
    %216 = vmatprep.subr.mxu0 0.0
    %217 = vmatpush1.msra.mxu0 0.0
    %218 = vmatprep.subr.mxu0 0.0
    %219 = vmatpush1.msra.mxu0 0.0
    %220 = vmatprep.subr.mxu0 0.0
    %221 = vmatpush1.msra.mxu0 0.0
    %222 = vmatprep.subr.mxu0 0.0
    %223 = vmatpush1.msra.mxu0 0.0
    %224 = vmatprep.subr.mxu0 0.0
    %225 = vmatpush1.msra.mxu0 0.0
    %226 = vmatprep.subr.mxu0 0.0
    %227 = vmatpush1.msra.mxu0 0.0
    %228 = vmatprep.subr.mxu0 0.0
    %229 = vmatpush1.msra.mxu0 0.0
    %230 = vmatprep.subr.mxu0 0.0
    %231 = vmatpush1.msra.mxu0 0.0
    %232 = vmatprep.subr.mxu0 0.0
    %233 = vmatpush1.msra.mxu0 0.0
    %234 = vmatprep.subr.mxu0 0.0
    %235 = vmatpush1.msra.mxu0 0.0
    %236 = vmatprep.subr.mxu0 0.0
    %237 = vmatpush1.msra.mxu0 0.0
    %238 = vmatprep.subr.mxu0 0.0
    %239 = vmatpush1.msra.mxu0 0.0
    %240 = vmatprep.subr.mxu0 0.0
    %241 = vmatpush1.msra.mxu0 0.0
    %242 = vmatprep.subr.mxu0 0.0
    %243 = vmatpush1.msra.mxu0 0.0
    %244 = vmatprep.mubr.f32.mxu0 0.0
    %245 = vmatmul.mubr.f32.gmra.mrb[0].mxu0 %v178
    %v246 = vpop.f32.mrb[0].mxu0
    %v247 = vadd.f32 %v174, %v246
    %v248 = vpop.f32.mrb[0].mxu0
    %249 = vdwg.mxu0
    %v250 = vmax.f32 %v247, 0.0
    %v251 = vld [vmem:[%s5] sm:$0xff]
    %v252 = vld [vmem:[%s5 + $0x8] sm:$0xff]
    %v253 = vld [vmem:[%s6] sm:$0x1]
    %v255 = vlaneseq
    %v256 = vshrl.u32 %v255, 7
    %v257 = vsub.s32 0, %v256
    %v258 = vrot.slane %v253, %v257
    %vm260 = vcmask 130048
    %v262 = vsel %vm260, %v250, 0
    %264 = vmatprep.subr.mxu0 0.0
    %265 = vmatpush1.msra.mxu0 %v251
    %266 = vmatprep.subr.mxu0 0.0
    %267 = vmatpush1.msra.mxu0 %v252
    %268 = vmatprep.subr.mxu0 0.0
    %269 = vmatpush1.msra.mxu0 0.0
    %270 = vmatprep.subr.mxu0 0.0
    %271 = vmatpush1.msra.mxu0 0.0
    %272 = vmatprep.subr.mxu0 0.0
    %273 = vmatpush1.msra.mxu0 0.0
    %274 = vmatprep.subr.mxu0 0.0
    %275 = vmatpush1.msra.mxu0 0.0
    %276 = vmatprep.subr.mxu0 0.0
    %277 = vmatpush1.msra.mxu0 0.0
    %278 = vmatprep.subr.mxu0 0.0
    %279 = vmatpush1.msra.mxu0 0.0
    %280 = vmatprep.subr.mxu0 0.0
    %281 = vmatpush1.msra.mxu0 0.0
    %282 = vmatprep.subr.mxu0 0.0
    %283 = vmatpush1.msra.mxu0 0.0
    %284 = vmatprep.subr.mxu0 0.0
    %285 = vmatpush1.msra.mxu0 0.0
    %286 = vmatprep.subr.mxu0 0.0
    %287 = vmatpush1.msra.mxu0 0.0
    %288 = vmatprep.subr.mxu0 0.0
    %289 = vmatpush1.msra.mxu0 0.0
    %290 = vmatprep.subr.mxu0 0.0
    %291 = vmatpush1.msra.mxu0 0.0
    %292 = vmatprep.subr.mxu0 0.0
    %293 = vmatpush1.msra.mxu0 0.0
    %294 = vmatprep.subr.mxu0 0.0
    %295 = vmatpush1.msra.mxu0 0.0
    %296 = vmatprep.subr.mxu0 0.0
    %297 = vmatpush1.msra.mxu0 0.0
    %298 = vmatprep.subr.mxu0 0.0
    %299 = vmatpush1.msra.mxu0 0.0
    %300 = vmatprep.subr.mxu0 0.0
    %301 = vmatpush1.msra.mxu0 0.0
    %302 = vmatprep.subr.mxu0 0.0
    %303 = vmatpush1.msra.mxu0 0.0
    %304 = vmatprep.subr.mxu0 0.0
    %305 = vmatpush1.msra.mxu0 0.0
    %306 = vmatprep.subr.mxu0 0.0
    %307 = vmatpush1.msra.mxu0 0.0
    %308 = vmatprep.subr.mxu0 0.0
    %309 = vmatpush1.msra.mxu0 0.0
    %310 = vmatprep.subr.mxu0 0.0
    %311 = vmatpush1.msra.mxu0 0.0
    %312 = vmatprep.subr.mxu0 0.0
    %313 = vmatpush1.msra.mxu0 0.0
    %314 = vmatprep.subr.mxu0 0.0
    %315 = vmatpush1.msra.mxu0 0.0
    %316 = vmatprep.subr.mxu0 0.0
    %317 = vmatpush1.msra.mxu0 0.0
    %318 = vmatprep.subr.mxu0 0.0
    %319 = vmatpush1.msra.mxu0 0.0
    %320 = vmatprep.subr.mxu0 0.0
    %321 = vmatpush1.msra.mxu0 0.0
    %322 = vmatprep.subr.mxu0 0.0
    %323 = vmatpush1.msra.mxu0 0.0
    %324 = vmatprep.subr.mxu0 0.0
    %325 = vmatpush1.msra.mxu0 0.0
    %326 = vmatprep.subr.mxu0 0.0
    %327 = vmatpush1.msra.mxu0 0.0
    %328 = vmatprep.mubr.f32.mxu0 0.0
    %329 = vmatmul.mubr.f32.gmra.mrb[0].mxu0 %v262
    %v330 = vpop.f32.mrb[0].mxu0
    %v331 = vadd.f32 %v258, %v330
    %v332 = vpop.f32.mrb[0].mxu0
    %333 = vdwg.mxu0
    %v334 = vxor.u32 %v331, 2147483648
    %v335 = vmul.f32 %v334, 1.442695
    %v336 = vpow.pop %v335
    %v337 = vadd.f32 %v336, 1.0
    %v338 = vrcp.pop %v337
    %v339 = vmul.f32 1.0, %v338
    %vm340 = vcmask 64512
    %341 = vst.msk [vmem:[#allocation2] sm:$0xff] %vm340, %v339
    // Predicated region
    $region30: #{tpu_custom_call.1} parent=1 // pred_check
      _
    $region31: #{tpu_custom_call.1} parent=1 // pred_check_branch
      %343 = sbr.rel (0) target = $region33
    $region32: #{tpu_custom_call.1} parent=1 // pred_region
      %s345 = ssub.s32 128, 128
      %346 = vsyncadd [#allocation3], %s345
      %s348 = sshll.u32 [#allocation2], 4
      %s349 = int_to_ptr.vmem [resolvable:$true] %s348
      %351 = dma.vmem_to_hbm [thread:$0]  %s349, 128, %s7, [#allocation3]
    $region33: #{tpu_custom_call.1} parent=1 // pred_fallthru
      _
    // Predicated region
    $region34: #{tpu_custom_call.1} parent=1 // pred_check
      _
    $region35: #{tpu_custom_call.1} parent=1 // pred_check_branch
      %353 = sbr.rel (0) target = $region37
    $region36: #{tpu_custom_call.1} parent=1 // pred_region
      %354 = dma.done [#allocation3], 128
    $region37: #{tpu_custom_call.1} parent=1 // pred_fallthru
      _
    %355 = vsyncpa [#allocation3], 1

</llo_original>
